<compile_context>
chip_gen: v7x
topology: tpu7x:2x2x1
jax: 0.10.0
libtpu: 0.0.40
codegen_flags: <defaults>
</compile_context>

<pallas_src>
import functools

import jax
import jax.numpy as jnp
from jax.experimental import pallas as pl
from jax.experimental.pallas import tpu as pltpu


# ----------------------------------------------------------------------------
# Helpers
# ----------------------------------------------------------------------------
def _pick_tile(dim, target, align):
    """Largest tile <= target that is a multiple of `align` and divides `dim`.

    Falls back to the full dimension (always legal: block dim == array dim).
    """
    if dim <= target:
        return dim
    t = (target // align) * align
    while t >= align:
        if dim % t == 0:
            return t
        t -= align
    return dim


_VMEM_LIMIT = 48 * 1024 * 1024  # safe on v5e/v6e (128 MiB) and v7x (64 MiB)


# ----------------------------------------------------------------------------
# Tiled, pipelined matmul (bf16 operands, f32 accumulation)
# ----------------------------------------------------------------------------
def _matmul_kernel(x_ref, w_ref, o_ref, acc_ref):
    @pl.when(pl.program_id(2) == 0)
    def _():
        acc_ref[...] = jnp.zeros_like(acc_ref)

    acc_ref[...] += jnp.dot(
        x_ref[...], w_ref[...], preferred_element_type=jnp.float32
    )

    @pl.when(pl.program_id(2) == pl.num_programs(2) - 1)
    def _():
        o_ref[...] = acc_ref[...].astype(o_ref.dtype)


def _tiled_matmul(x, w, out_dtype=jnp.bfloat16):
    """x: (M, K), w: (K, N) -> (M, N).  Tiled over (M, N, K) with a resident
    f32 accumulator; operands are cast to bf16 for the MXU."""
    M, K = x.shape
    K2, N = w.shape
    assert K == K2
    # Conservative tile targets that fit comfortably on all generations
    # (v7x 64 MiB VMEM included); larger tiles are legal on v6e.
    tm = _pick_tile(M, 256, 8)
    tk = _pick_tile(K, 512, 128)
    tn = _pick_tile(N, 256, 128)
    grid = (M // tm, N // tn, K // tk)
    return pl.pallas_call(
        _matmul_kernel,
        out_shape=jax.ShapeDtypeStruct((M, N), out_dtype),
        grid=grid,
        in_specs=[
            pl.BlockSpec((tm, tk), lambda i, j, k: (i, k)),
            pl.BlockSpec((tk, tn), lambda i, j, k: (k, j)),
        ],
        out_specs=pl.BlockSpec((tm, tn), lambda i, j, k: (i, j)),
        scratch_shapes=[pltpu.VMEM((tm, tn), jnp.float32)],
        compiler_params=pltpu.CompilerParams(
            dimension_semantics=("parallel", "parallel", "arbitrary"),
            vmem_limit_bytes=_VMEM_LIMIT,
        ),
    )(x.astype(jnp.bfloat16), w.astype(jnp.bfloat16))


# ----------------------------------------------------------------------------
# Fused attention + output projection kernel
# ----------------------------------------------------------------------------
def _attention_body(q_ref, k_ref, v_ref, wo_ref, mask_ref, o_ref, n_heads, dk, dv):
    """One (batch, query-tile) block: all heads + fused W_o projection.

    q_ref: (1, tq, H*dk)   k_ref: (1, S, H*dk)   v_ref: (1, S, H*dv)
    wo_ref: (H*dv, d_model)   mask_ref: (1, H, tq, S) or None
    o_ref: (1, tq, d_model)
    """
    f32 = jnp.float32
    bf16 = jnp.bfloat16
    q = q_ref[0]       # (tq, H*dk) bf16
    k = k_ref[0]       # (S,  H*dk) bf16
    v = v_ref[0]       # (S,  H*dv) bf16
    wo = wo_ref[...]   # (H*dv, d_model) bf16
    scale = 1.0 / (dk ** 0.5)

    acc = jnp.zeros((q.shape[0], wo.shape[1]), f32)   # (tq, d_model)
    for h in range(n_heads):                          # static unroll over heads
        qh = q[:, h * dk:(h + 1) * dk]                # (tq, dk)
        kh = k[:, h * dk:(h + 1) * dk]                # (S, dk)
        vh = v[:, h * dv:(h + 1) * dv]                # (S, dv)

        # q @ k^T without an explicit transpose: contract over head_dim.
        s = jax.lax.dot_general(
            qh, kh, (((1,), (1,)), ((), ())), preferred_element_type=f32
        ) * scale                                     # (tq, S)

        if mask_ref is not None:
            s = jnp.where(mask_ref[0, h] != 0, s, -1e30)

        # Softmax over keys (f32 statistics, EUP reciprocal).
        s = s - jnp.max(s, axis=-1, keepdims=True)
        e = jnp.exp(s)
        p = e * pl.reciprocal(jnp.sum(e, axis=-1, keepdims=True), approx=True)

        ctx = jnp.dot(p.astype(bf16), vh, preferred_element_type=f32)  # (tq, dv)

        # Fused output projection:
        #   [ctx_0 | ... | ctx_{H-1}] @ W_o == sum_h ctx_h @ W_o[h*dv:(h+1)*dv]
        acc = acc + jnp.dot(
            ctx.astype(bf16), wo[h * dv:(h + 1) * dv, :], preferred_element_type=f32
        )
    # TODO(synk): flash-style online-softmax KV loop for very long sequences.
    o_ref[0] = acc.astype(o_ref.dtype)


def _attn_kernel(q_ref, k_ref, v_ref, wo_ref, o_ref, *, n_heads, dk, dv):
    _attention_body(q_ref, k_ref, v_ref, wo_ref, None, o_ref, n_heads, dk, dv)


def _attn_kernel_masked(q_ref, k_ref, v_ref, wo_ref, mask_ref, o_ref, *,
                        n_heads, dk, dv):
    _attention_body(q_ref, k_ref, v_ref, wo_ref, mask_ref, o_ref, n_heads, dk, dv)


def _fused_attention_proj(q, k, v, w_o, mask, *, n_heads, dk, dv):
    """q: (B, S, H*dk), k: (B, S, H*dk), v: (B, S, H*dv), w_o: (H*dv, d_model),
    mask: (B, H, S, S) int32 or None  ->  (B, S, d_model) float32."""
    B, S, hdk = q.shape
    hdv = v.shape[-1]
    d_model = w_o.shape[-1]
    tq = _pick_tile(S, 128, 8)            # query tile (bounds score memory)
    grid = (B, S // tq)

    in_specs = [
        pl.BlockSpec((1, tq, hdk), lambda b, qi: (b, qi, 0)),
        pl.BlockSpec((1, S, hdk), lambda b, qi: (b, 0, 0)),
        pl.BlockSpec((1, S, hdv), lambda b, qi: (b, 0, 0)),
        pl.BlockSpec((hdv, d_model), lambda b, qi: (0, 0)),   # W_o stays resident
    ]
    args = [q, k, v, w_o.astype(jnp.bfloat16)]
    if mask is not None:
        in_specs.append(pl.BlockSpec((1, n_heads, tq, S), lambda b, qi: (b, 0, qi, 0)))
        args.append(mask)
        kernel = functools.partial(_attn_kernel_masked, n_heads=n_heads, dk=dk, dv=dv)
    else:
        kernel = functools.partial(_attn_kernel, n_heads=n_heads, dk=dk, dv=dv)

    return pl.pallas_call(
        kernel,
        out_shape=jax.ShapeDtypeStruct((B, S, d_model), jnp.float32),
        grid=grid,
        in_specs=in_specs,
        out_specs=pl.BlockSpec((1, tq, d_model), lambda b, qi: (b, qi, 0)),
        compiler_params=pltpu.CompilerParams(
            dimension_semantics=("parallel", "parallel"),
            vmem_limit_bytes=_VMEM_LIMIT,
        ),
    )(*args)


# ----------------------------------------------------------------------------
# MultiHeadAttention forward (glue in plain JAX, hot paths in Pallas)
# ----------------------------------------------------------------------------
class MultiHeadAttentionPallas:
    def __init__(self, n_heads, d_model, dk, dv, key):
        self.n_heads = n_heads
        self.d_model = d_model
        self.dk = dk
        self.dv = dv
        k1, k2, k3, k4 = jax.random.split(key, 4)
        # PyTorch nn.Linear weight is (out, in); y = x @ W.T.  We store the
        # already-transposed (in, out) matrices, in bf16 for the MXU.
        s = 0.05
        wq = s * jax.random.normal(k1, (d_model, n_heads * dk), jnp.float32)
        wk = s * jax.random.normal(k2, (d_model, n_heads * dk), jnp.float32)
        wv = s * jax.random.normal(k3, (d_model, n_heads * dv), jnp.float32)
        wo = s * jax.random.normal(k4, (n_heads * dv, d_model), jnp.float32)
        self.w_q_t = wq.astype(jnp.bfloat16)
        self.w_k_t = wk.astype(jnp.bfloat16)
        self.w_v_t = wv.astype(jnp.bfloat16)
        self.w_o_t = wo.astype(jnp.bfloat16)
        # Fused QKV weight for the self-attention fast path.
        self.w_qkv_t = jnp.concatenate([wq, wk, wv], axis=1).astype(jnp.bfloat16)

    def __call__(self, Q, K, V, mask=None):
        B, S, _ = Q.shape
        H, dk, dv, dm = self.n_heads, self.dk, self.dv, self.d_model

        if (Q is K) and (K is V):
            # Self-attention fast path: one fused, tiled QKV matmul
            # (reads the activation from HBM once, wide-N MXU utilization).
            qkv = _tiled_matmul(Q.reshape(B * S, dm), self.w_qkv_t)
            q2d = qkv[:, :H * dk]
            k2d = qkv[:, H * dk:2 * H * dk]
            v2d = qkv[:, 2 * H * dk:]
        else:
            # TODO(synk): grouped single-pallas_call QKV projection for
            # cross-attention (distinct Q/K/V tensors).
            q2d = _tiled_matmul(Q.reshape(B * S, dm), self.w_q_t)
            k2d = _tiled_matmul(K.reshape(B * S, dm), self.w_k_t)
            v2d = _tiled_matmul(V.reshape(B * S, dm), self.w_v_t)

        # Keep (B, S, H*d) layout end-to-end — no (0,2,1,3) transposes in XLA;
        # heads are sliced out of the lane dimension inside the kernel.
        q = q2d.reshape(B, S, H * dk)
        k = k2d.reshape(B, S, H * dk)
        v = v2d.reshape(B, S, H * dv)

        mask_b = None
        if mask is not None:
            # torch masked_fill broadcasting semantics onto (B, H, S, S).
            mask_b = jnp.broadcast_to(mask, (B, H, S, S)).astype(jnp.int32)

        # Fused attention (all heads per block) + output projection.
        return _fused_attention_proj(q, k, v, self.w_o_t, mask_b,
                                     n_heads=H, dk=dk, dv=dv)


# ----------------------------------------------------------------------------
# Pure-JAX reference (mirrors the kernel's bf16-operand / f32-accum rounding)
# ----------------------------------------------------------------------------
def _reference_forward(mha, Q, K, V, mask=None):
    f32, bf16 = jnp.float32, jnp.bfloat16
    B, S, _ = Q.shape
    H, dk, dv = mha.n_heads, mha.dk, mha.dv

    def mm(a, b):
        return jnp.dot(a.astype(bf16), b.astype(bf16), preferred_element_type=f32)

    q = mm(Q.reshape(B * S, -1), mha.w_q_t).astype(bf16).reshape(B, S, H, dk)
    k = mm(K.reshape(B * S, -1), mha.w_k_t).astype(bf16).reshape(B, S, H, dk)
    v = mm(V.reshape(B * S, -1), mha.w_v_t).astype(bf16).reshape(B, S, H, dv)

    scores = jnp.einsum("bqhd,bkhd->bhqk", q, k,
                        preferred_element_type=f32) / (dk ** 0.5)
    if mask is not None:
        m = jnp.broadcast_to(mask, (B, H, S, S))
        scores = jnp.where(m != 0, scores, -1e30)
    p = jax.nn.softmax(scores, axis=-1)
    ctx = jnp.einsum("bhqk,bkhd->bqhd", p.astype(bf16), v,
                     preferred_element_type=f32)
    ctx = ctx.reshape(B, S, H * dv).astype(bf16)
    out = jnp.dot(ctx.reshape(B * S, -1), mha.w_o_t.astype(bf16),
                  preferred_element_type=f32)
    return out.reshape(B, S, -1)


if __name__ == "__main__":
    key = jax.random.PRNGKey(0)
    k_params, k_x, k_k, k_v = jax.random.split(key, 4)

    batch, seq, d_model = 2, 8, 32
    n_heads, dk, dv = 4, 8, 8

    mha = MultiHeadAttentionPallas(n_heads, d_model, dk, dv, k_params)

    X = jax.random.normal(k_x, (batch, seq, d_model), jnp.float32)

    # 1) Self-attention (fused-QKV fast path), no mask.
    out_self = jax.block_until_ready(mha(X, X, X))
    ref_self = _reference_forward(mha, X, X, X)
    assert out_self.shape == (batch, seq, d_model)
    assert jnp.allclose(out_self, ref_self, atol=5e-3, rtol=5e-3), \
        "self-attention mismatch vs reference"

    # 2) Cross-attention path (distinct K/V) with a causal mask.
    Kx = jax.random.normal(k_k, (batch, seq, d_model), jnp.float32)
    Vx = jax.random.normal(k_v, (batch, seq, d_model), jnp.float32)
    causal = jnp.tril(jnp.ones((seq, seq), jnp.int32))
    out_cross = jax.block_until_ready(mha(X, Kx, Vx, mask=causal))
    ref_cross = _reference_forward(mha, X, Kx, Vx, mask=causal)
    assert out_cross.shape == (batch, seq, d_model)
    assert jnp.allclose(out_cross, ref_cross, atol=5e-3, rtol=5e-3), \
        "masked cross-attention mismatch vs reference"

    print("KERNEL_OK")
</pallas_src>

<mosaic_0001>
module attributes {stable_mosaic.version = 11 : i64} {
  func.func @_matmul_kernel(%arg0: i32, %arg1: i32, %arg2: i32, %arg3: memref<16x32xbf16, #tpu.memory_space<vmem>>, %arg4: memref<32x96xbf16, #tpu.memory_space<vmem>>, %arg5: memref<16x96xbf16, #tpu.memory_space<vmem>>, %arg6: memref<16x96xf32, #tpu.memory_space<vmem>>) attributes {dimension_semantics = [#tpu.dimension_semantics<parallel>, #tpu.dimension_semantics<parallel>, #tpu.dimension_semantics<arbitrary>], iteration_bounds = array<i64: 1, 1, 1>, scalar_prefetch = 0 : i64, scratch_operands = 1 : i64, tpu.core_type = #tpu.core_type<tc>, window_params = [{transform_indices = @transform_0, window_bounds = array<i64: 16, 32>}, {transform_indices = @transform_1, window_bounds = array<i64: 32, 96>}, {transform_indices = @transform_2, window_bounds = array<i64: 16, 96>}]} {
    %c0_i32 = arith.constant 0 : i32
    %0 = arith.cmpi eq, %arg2, %c0_i32 : i32
    %1 = arith.extui %0 : i1 to i32
    %c0_i32_0 = arith.constant 0 : i32
    %2 = arith.cmpi ne, %1, %c0_i32_0 : i32
    scf.if %2 {
      %cst_10 = arith.constant 0.000000e+00 : f32
      %12 = vector.broadcast %cst_10 : f32 to vector<16x96xf32>
      %c0_11 = arith.constant 0 : index
      %c0_12 = arith.constant 0 : index
      %13 = vector.load %arg6[%c0_11, %c0_12] : memref<16x96xf32, #tpu.memory_space<vmem>>, vector<16x96xf32>
      tpu.vector_store %arg6[%c0_11, %c0_12], %12 {strides = array<i32>} : memref<16x96xf32, #tpu.memory_space<vmem>>, vector<16x96xf32>,
    } else {
    }
    %c0 = arith.constant 0 : index
    %c0_1 = arith.constant 0 : index
    %3 = vector.load %arg6[%c0, %c0_1] : memref<16x96xf32, #tpu.memory_space<vmem>>, vector<16x96xf32>
    %c0_2 = arith.constant 0 : index
    %c0_3 = arith.constant 0 : index
    %4 = vector.load %arg3[%c0_2, %c0_3] : memref<16x32xbf16, #tpu.memory_space<vmem>>, vector<16x32xbf16>
    %c0_4 = arith.constant 0 : index
    %c0_5 = arith.constant 0 : index
    %5 = vector.load %arg4[%c0_4, %c0_5] : memref<32x96xbf16, #tpu.memory_space<vmem>>, vector<32x96xbf16>
    %cst = arith.constant dense<0.000000e+00> : vector<16x96xf32>
    %6 = tpu.matmul %4, %5, %cst {dimension_numbers = #tpu.dot_dimension_numbers<[1], [0], [0], [1], [0, 0, 1, 1], [], []>} : vector<16x32xbf16>, vector<32x96xbf16>, vector<16x96xf32> -> vector<16x96xf32>
    %7 = arith.addf %3, %6 : vector<16x96xf32>
    %c0_6 = arith.constant 0 : index
    %c0_7 = arith.constant 0 : index
    %8 = vector.load %arg6[%c0_6, %c0_7] : memref<16x96xf32, #tpu.memory_space<vmem>>, vector<16x96xf32>
    tpu.vector_store %arg6[%c0_6, %c0_7], %7 {strides = array<i32>} : memref<16x96xf32, #tpu.memory_space<vmem>>, vector<16x96xf32>,
    %c0_i32_8 = arith.constant 0 : i32
    %9 = arith.cmpi eq, %arg2, %c0_i32_8 : i32
    %10 = arith.extui %9 : i1 to i32
    %c0_i32_9 = arith.constant 0 : i32
    %11 = arith.cmpi ne, %10, %c0_i32_9 : i32
    scf.if %11 {
      %c0_10 = arith.constant 0 : index
      %c0_11 = arith.constant 0 : index
      %12 = vector.load %arg6[%c0_10, %c0_11] : memref<16x96xf32, #tpu.memory_space<vmem>>, vector<16x96xf32>
      %13 = arith.truncf %12 : vector<16x96xf32> to vector<16x96xbf16>
      %c0_12 = arith.constant 0 : index
      %c0_13 = arith.constant 0 : index
      %14 = vector.load %arg5[%c0_12, %c0_13] : memref<16x96xbf16, #tpu.memory_space<vmem>>, vector<16x96xbf16>
      tpu.vector_store %arg5[%c0_12, %c0_13], %13 {strides = array<i32>} : memref<16x96xbf16, #tpu.memory_space<vmem>>, vector<16x96xbf16>,
    } else {
    }
    return
  }
  func.func @transform_0(%arg0: i32, %arg1: i32, %arg2: i32) -> (i32, i32) {
    %c0_i32 = arith.constant 0 : i32
    return %arg0, %arg2 : i32, i32
  }
  func.func @transform_1(%arg0: i32, %arg1: i32, %arg2: i32) -> (i32, i32) {
    %c0_i32 = arith.constant 0 : i32
    return %arg2, %arg1 : i32, i32
  }
  func.func @transform_2(%arg0: i32, %arg1: i32, %arg2: i32) -> (i32, i32) {
    %c0_i32 = arith.constant 0 : i32
    return %arg0, %arg1 : i32, i32
  }
}

</mosaic_0001>

<llo_original>
// kernel: tpu_custom_call.1
$region0: #{tpu_custom_call.1}
  #allocation0 [shape = 'u32[]', space=smem, size = 0x4, offset = 0x4, fixed_abs, tag = 'smem constant byte address 0x4 - core index']
  #allocation1 [shape = 'u32[144,128]{1,0:T(1,128)}', space=vmem, size = 0x12000, scoped, tag = 'internal scratch']
  #allocation2 [shape = 'f32[16,96]{1,0:T(8,128)}', space=vmem, size = 0x2000, scoped, tag = 'scratch operand']
  %s0 = inlined_call_operand.hbm [shape: bf16[16,32], index: 0, kind: input, shape index: {}]
  %s1 = inlined_call_operand.hbm [shape: bf16[32,96], index: 1, kind: input, shape index: {}]
  %s2 = inlined_call_operand.hbm [shape: bf16[16,96], index: 2, kind: output, shape index: {}]
  %s3 = sld [smem:[#allocation0]]
  $region34: #{tpu_custom_call.1} parent=0
    _
  %s5 = ssub.s32 1, %s3
  %s6 = scalar_select 0, %s5, %s3
  $region1: #{tpu_custom_call.1} parent=0
    #allocation3 [shape = 'u8[4096]{0}', space=vmem, size = 0x1000, scoped, tag = 'input window, operand 0, single buffered']
    #allocation4 [shape = 's32[1]{0}', space=sflag, size = 0x4, scoped, tag = 'scoped memory for tpu_custom_call.1']
    #allocation5 [shape = 's32[1]{0}', space=sflag, size = 0x4, scoped, tag = 'scoped memory for tpu_custom_call.1']
    #allocation6 [shape = 'u8[8192]{0}', space=vmem, size = 0x2000, scoped, tag = 'input window, operand 1, single buffered']
    #allocation7 [shape = 's32[1]{0}', space=sflag, size = 0x4, scoped, tag = 'scoped memory for tpu_custom_call.1']
    #allocation8 [shape = 'u8[4096]{0}', space=vmem, size = 0x1000, scoped, tag = 'output window, operand 0, single buffered']
    %7 = vsyncpa [#allocation4], 0
    %8 = vsyncpa [#allocation7], 0
    %9 = vsyncpa [#allocation5], 0
    // Predicated region
    $region2: #{tpu_custom_call.1} parent=1 // pred_check
      _
    $region3: #{tpu_custom_call.1} parent=1 // pred_check_branch
      %11 = sbr.rel (0) target = $region5
    $region4: #{tpu_custom_call.1} parent=1 // pred_region
      %s13 = ssub.s32 128, 128
      %14 = vsyncadd [#allocation4], %s13
      %s15 = sshll.u32 [#allocation3], 4
      %s16 = int_to_ptr.vmem [resolvable:$true] %s15
      %21 = dma.hbm_to_vmem [thread:$0]  %s0, 128, %s16, [#allocation4], 64, 64, 4
    $region5: #{tpu_custom_call.1} parent=1 // pred_fallthru
      _
    // Predicated region
    $region6: #{tpu_custom_call.1} parent=1 // pred_check
      _
    $region7: #{tpu_custom_call.1} parent=1 // pred_check_branch
      %23 = sbr.rel (0) target = $region9
    $region8: #{tpu_custom_call.1} parent=1 // pred_region
      %s25 = ssub.s32 256, 256
      %26 = vsyncadd [#allocation7], %s25
      %s27 = sshll.u32 [#allocation6], 4
      %s28 = int_to_ptr.vmem [resolvable:$true] %s27
      %33 = dma.hbm_to_vmem [thread:$0]  %s1, 256, %s28, [#allocation7], 64, 64, 4
    $region9: #{tpu_custom_call.1} parent=1 // pred_fallthru
      _
    // Predicated region
    $region10: #{tpu_custom_call.1} parent=1 // pred_check
      _
    $region11: #{tpu_custom_call.1} parent=1 // pred_check_branch
      %35 = sbr.rel (0) target = $region13
    $region12: #{tpu_custom_call.1} parent=1 // pred_region
      %36 = dma.done [#allocation4], 128
    $region13: #{tpu_custom_call.1} parent=1 // pred_fallthru
      _
    // Predicated region
    $region14: #{tpu_custom_call.1} parent=1 // pred_check
      _
    $region15: #{tpu_custom_call.1} parent=1 // pred_check_branch
      %38 = sbr.rel (0) target = $region17
    $region16: #{tpu_custom_call.1} parent=1 // pred_region
      %39 = dma.done [#allocation7], 256
    $region17: #{tpu_custom_call.1} parent=1 // pred_fallthru
      _
    %p41 = scmp.eq.s32.totalorder 0, 0
    // Predicated region
    $region18: #{tpu_custom_call.1} parent=1 // pred_check
      %p42 = pneg %p41
    $region19: #{tpu_custom_call.1} parent=1 // pred_check_branch
      %44 = sbr.rel (%p42) target = $region21
    $region20: #{tpu_custom_call.1} parent=1 // pred_region
      %vm45 = vcmask 785408
      %46 = vst.msk [vmem:[#allocation2] sm:$0xff] %vm45, 0.0
      %47 = vst.msk [vmem:[#allocation2 + $0x8] sm:$0xff] %vm45, 0.0
    $region21: #{tpu_custom_call.1} parent=1 // pred_fallthru
      _
    %v48 = vld [vmem:[#allocation2] sm:$0xff]
    %v49 = vld [vmem:[#allocation2 + $0x8] sm:$0xff]
    %v50 = vld [vmem:[#allocation3] sm:$0xf]
    %v51 = vld [vmem:[#allocation3 + $0x4] sm:$0xf]
    %v52 = vld [vmem:[#allocation6] sm:$0xf]
    %v53 = vld [vmem:[#allocation6 + $0x4] sm:$0xf]
    %v54 = vld [vmem:[#allocation6 + $0x8] sm:$0xf]
    %v55 = vld [vmem:[#allocation6 + $0xc] sm:$0xf]
    %v58 = vunpack.c.l.b16 %v50
    %v59 = vunpack.c.l.b16 %v51
    %v60 = vpack.c.b16 %v59, %v58
    %v65 = vunpack.c.l.b16 %v52
    %v66 = vunpack.c.l.b16 %v53
    %v67 = vunpack.c.l.b16 %v54
    %v68 = vunpack.c.l.b16 %v55
    %v69 = vpack.c.b16 %v66, %v65
    %v70 = vpack.c.b16 %v68, %v67
    %vm73 = vcmask 261120
    %v75 = vsel %vm73, %v60, 0
    %77 = vmatprep.subr.bf16.mxu0 0
    %78 = vmatpush1.bf16.msra.mxu0 %v69
    %79 = vmatprep.subr.bf16.mxu0 0
    %80 = vmatpush1.bf16.msra.mxu0 %v70
    %81 = vmatprep.subr.bf16.mxu0 0
    %82 = vmatpush1.bf16.msra.mxu0 0
    %83 = vmatprep.subr.bf16.mxu0 0
    %84 = vmatpush1.bf16.msra.mxu0 0
    %85 = vmatprep.subr.bf16.mxu0 0
    %86 = vmatpush1.bf16.msra.mxu0 0
    %87 = vmatprep.subr.bf16.mxu0 0
    %88 = vmatpush1.bf16.msra.mxu0 0
    %89 = vmatprep.subr.bf16.mxu0 0
    %90 = vmatpush1.bf16.msra.mxu0 0
    %91 = vmatprep.subr.bf16.mxu0 0
    %92 = vmatpush1.bf16.msra.mxu0 0
    %93 = vmatprep.subr.bf16.mxu0 0
    %94 = vmatpush1.bf16.msra.mxu0 0
    %95 = vmatprep.subr.bf16.mxu0 0
    %96 = vmatpush1.bf16.msra.mxu0 0
    %97 = vmatprep.subr.bf16.mxu0 0
    %98 = vmatpush1.bf16.msra.mxu0 0
    %99 = vmatprep.subr.bf16.mxu0 0
    %100 = vmatpush1.bf16.msra.mxu0 0
    %101 = vmatprep.subr.bf16.mxu0 0
    %102 = vmatpush1.bf16.msra.mxu0 0
    %103 = vmatprep.subr.bf16.mxu0 0
    %104 = vmatpush1.bf16.msra.mxu0 0
    %105 = vmatprep.subr.bf16.mxu0 0
    %106 = vmatpush1.bf16.msra.mxu0 0
    %107 = vmatprep.subr.bf16.mxu0 0
    %108 = vmatpush1.bf16.msra.mxu0 0
    %109 = vmatprep.mubr.bf16.mxu0 0
    %110 = vmatmul.mubr.bf16.gmra.mrb[0].mxu0 %v75
    %v111 = vpop.f32.mrb[0].mxu0
    %v112 = vadd.f32 0.0, %v111
    %v113 = vpop.f32.mrb[0].mxu0
    %v114 = vpop.f32.mrb[0].mxu0
    %v115 = vadd.f32 0.0, %v114
    %v116 = vpop.f32.mrb[0].mxu0
    %117 = vdwg.mxu0
    %v118 = vadd.f32 %v48, %v112
    %v119 = vadd.f32 %v49, %v115
    %vm120 = vcmask 785408
    %121 = vst.msk [vmem:[#allocation2] sm:$0xff] %vm120, %v118
    %122 = vst.msk [vmem:[#allocation2 + $0x8] sm:$0xff] %vm120, %v119
    // Predicated region
    $region22: #{tpu_custom_call.1} parent=1 // pred_check
      %p123 = pneg %p41
    $region23: #{tpu_custom_call.1} parent=1 // pred_check_branch
      %125 = sbr.rel (%p123) target = $region25
    $region24: #{tpu_custom_call.1} parent=1 // pred_region
      %v126 = vld [vmem:[#allocation2] sm:$0xff]
      %v127 = vld [vmem:[#allocation2 + $0x8] sm:$0xff]
      %v128 = vpack.c.bf16 %v127, %v126
      %v130 = vunpack.c.l.b16 %v128
      %v131 = vunpack.c.h.b16 %v128
      %v132 = vpack.c.b16 %v130, %v130
      %v133 = vpack.c.b16 %v131, %v131
      %vm136 = vcmask 781312
      %137 = vst.msk [vmem:[#allocation8] sm:$0xf] %vm136, %v132
      %138 = vst.msk [vmem:[#allocation8 + $0x4] sm:$0xf] %vm136, %v133
    $region25: #{tpu_custom_call.1} parent=1 // pred_fallthru
      _
    // Predicated region
    $region26: #{tpu_custom_call.1} parent=1 // pred_check
      _
    $region27: #{tpu_custom_call.1} parent=1 // pred_check_branch
      %140 = sbr.rel (0) target = $region29
    $region28: #{tpu_custom_call.1} parent=1 // pred_region
      %s142 = ssub.s32 128, 128
      %143 = vsyncadd [#allocation5], %s142
      %s144 = sshll.u32 [#allocation8], 4
      %s145 = int_to_ptr.vmem [resolvable:$true] %s144
      %150 = dma.vmem_to_hbm [thread:$0]  %s145, 128, %s2, [#allocation5], 64, 64, 4
    $region29: #{tpu_custom_call.1} parent=1 // pred_fallthru
      _
    // Predicated region
    $region30: #{tpu_custom_call.1} parent=1 // pred_check
      _
    $region31: #{tpu_custom_call.1} parent=1 // pred_check_branch
      %152 = sbr.rel (0) target = $region33
    $region32: #{tpu_custom_call.1} parent=1 // pred_region
      %153 = dma.done [#allocation5], 128
    $region33: #{tpu_custom_call.1} parent=1 // pred_fallthru
      _
    %154 = vsyncpa [#allocation4], 1
    %155 = vsyncpa [#allocation7], 1
    %156 = vsyncpa [#allocation5], 1

</llo_original>
